<compile_context>
chip_gen: v7x
topology: tpu7x:2x2x1
jax: 0.10.0
libtpu: 0.0.40
codegen_flags: <defaults>
</compile_context>

<pallas_src>
import numpy as np
import jax
import jax.numpy as jnp
from jax import lax
from jax.experimental import pallas as pl
from jax.experimental.pallas import tpu as pltpu

EPS = 1e-5


def basic_block_kernel(x_ref, wb1_ref, g1_ref, b1_ref,
                       wb2_ref, g2_ref, b2_ref, fm_ref, o_ref):
    """Whole BasicBlock in one invocation (all operands VMEM-resident).

    x_ref       : (H, B*W*C)        input in row-slab layout (also the residual)
    wb*_ref     : (3*B*W*C, B*W*C)  banded conv weights (kh stacked along K)
    g*/b*_ref   : (1, B*W*C)        BN gamma/beta replicated per lane
    fm_ref      : (B*W*C, B*W*C)    channel-pooling matrix: lane sums -> per-channel
                                    mean, broadcast back across lanes (one MXU op)
    o_ref       : (H, B*W*C)        output (lane-dense, unmasked store)
    """
    H, L = x_ref.shape
    zrow = jnp.zeros((1, L), jnp.float32)

    def conv_bn(inp, wb_ref, g_ref, b_ref):
        # rows h-1 / h / h+1 with zero halo rows, K-concatenated -> single matmul
        up = jnp.concatenate([zrow, inp[:H - 1, :]], axis=0)
        dn = jnp.concatenate([inp[1:, :], zrow], axis=0)
        patches = jnp.concatenate([up, inp, dn], axis=1)          # (H, 3L)
        acc = jnp.dot(patches, wb_ref[...],
                      preferred_element_type=jnp.float32)         # (H, L)
        # one-pass BN stats: sublane-reduce sum & sum-of-squares, then one tiny
        # MXU matmul folds lanes to per-channel E[x], E[x^2] and broadcasts back.
        rowsum = jnp.sum(acc, axis=0, keepdims=True)
        rowsq = jnp.sum(acc * acc, axis=0, keepdims=True)
        stats = jnp.dot(jnp.concatenate([rowsum, rowsq], axis=0), fm_ref[...],
                        preferred_element_type=jnp.float32)       # (2, L)
        mean = stats[0:1, :]
        var = stats[1:2, :] - mean * mean                         # biased variance
        return (acc - mean) * lax.rsqrt(var + EPS) * g_ref[...] + b_ref[...]

    h1 = jnp.maximum(conv_bn(x_ref[...], wb1_ref, g1_ref, b1_ref), 0.0)
    out = conv_bn(h1, wb2_ref, g2_ref, b2_ref) + x_ref[...]       # residual from x itself
    o_ref[...] = jnp.maximum(out, 0.0)


def _band_matrix(w_oihw, batch, width):
    """OIHW (Cout,Cin,3,3) -> (3*B*W*Cin, B*W*Cout) block-banded matmul weight.

    Row index  kh*(B*W*Cin) + Q*Cin + ci   (Q = source pixel b*W + w_in)
    Col index  P*Cout + co                 (P = output pixel b*W + w_out)
    Entry is w[co, ci, kh, kw] with kw = Q-P+1, zero when the tap crosses the
    width boundary of an image (this bakes the horizontal zero-padding in).
    """
    c_out, c_in, _, _ = w_oihw.shape
    bw = batch * width
    pix = np.arange(bw)
    bands = []
    for kh in range(3):
        mat = jnp.zeros((bw * c_in, bw * c_out), jnp.float32)
        for kw in range(3):
            d = kw - 1
            src = pix + d
            valid = (src >= 0) & (src < bw) & (src // width == pix // width)
            sel = np.zeros((bw, bw), np.float32)
            sel[src[valid], pix[valid]] = 1.0
            tap = jnp.transpose(w_oihw[:, :, kh, kw]).astype(jnp.float32)  # (Cin, Cout)
            mat = mat + jnp.kron(jnp.asarray(sel), tap)
        bands.append(mat)
    return jnp.concatenate(bands, axis=0)


@jax.jit
def basic_block(x_nchw, w1, g1, b1, w2, g2, b2):
    """x_nchw: (B, Cin, H, W); conv weights in torch OIHW layout (Cout, Cin, 3, 3)."""
    batch, c_in, height, width = x_nchw.shape
    c_out = w1.shape[0]
    assert c_in == c_out, "BasicBlock with downsample=None requires inplanes == planes"
    bw = batch * width
    lanes = bw * c_out

    # NCHW -> (H, B, W, C) -> (H, B*W*C): lane-dense row-slab layout.
    # (pure layout plumbing on a tiny tensor; no zero-padded HBM copy is made)
    x2d = jnp.transpose(x_nchw, (2, 0, 3, 1)).reshape(height, bw * c_in).astype(jnp.float32)

    wb1 = _band_matrix(w1, batch, width)
    wb2 = _band_matrix(w2, batch, width)

    # per-lane BN affine params: lane = P*Cout + c  ->  gamma[c], beta[c]
    g1l = jnp.tile(g1.astype(jnp.float32), bw).reshape(1, lanes)
    b1l = jnp.tile(b1.astype(jnp.float32), bw).reshape(1, lanes)
    g2l = jnp.tile(g2.astype(jnp.float32), bw).reshape(1, lanes)
    b2l = jnp.tile(b2.astype(jnp.float32), bw).reshape(1, lanes)

    # channel-pooling matrix: (lane sums) @ fm = per-channel mean replicated
    # across all lanes; constant, folds the XLU cross-lane reduce onto the MXU.
    fm = jnp.asarray(np.kron(np.ones((bw, bw), np.float32),
                             np.eye(c_out, dtype=np.float32)) / float(height * bw))

    vmem = pl.BlockSpec(memory_space=pltpu.MemorySpace.VMEM)
    out2d = pl.pallas_call(
        basic_block_kernel,
        out_shape=jax.ShapeDtypeStruct((height, lanes), jnp.float32),
        in_specs=[vmem] * 8,
        out_specs=vmem,
    )(x2d, wb1, g1l, b1l, wb2, g2l, b2l, fm)

    # (H, B*W*Cout) -> (H, B, W, Cout) -> NCHW
    return jnp.transpose(out2d.reshape(height, batch, width, c_out), (1, 3, 0, 2))


def reference(x_nchw, w1, g1, b1, w2, g2, b2):
    """Pure-JAX reference matching the PyTorch BasicBlock (train-mode BN)."""
    def conv3x3(x, w):
        return lax.conv_general_dilated(
            x, w, window_strides=(1, 1), padding=((1, 1), (1, 1)),
            dimension_numbers=("NCHW", "OIHW", "NCHW"))

    def bn(x, g, b):
        mean = jnp.mean(x, axis=(0, 2, 3), keepdims=True)
        var = jnp.mean((x - mean) ** 2, axis=(0, 2, 3), keepdims=True)
        return ((x - mean) * lax.rsqrt(var + EPS)
                * g.reshape(1, -1, 1, 1) + b.reshape(1, -1, 1, 1))

    out = jax.nn.relu(bn(conv3x3(x_nchw, w1), g1, b1))
    out = bn(conv3x3(out, w2), g2, b2)
    return jax.nn.relu(out + x_nchw)


if __name__ == "__main__":
    key = jax.random.PRNGKey(0)
    kx, k1, k2, kg1, kb1, kg2, kb2 = jax.random.split(key, 7)

    B, C, H, W = 2, 4, 16, 16          # inplanes = planes = 4, stride = 1
    x = jax.random.normal(kx, (B, C, H, W), jnp.float32)

    # deterministic synthetic parameters (shapes from BasicBlock.__init__)
    w1 = 0.2 * jax.random.normal(k1, (C, C, 3, 3), jnp.float32)   # conv1 weight
    w2 = 0.2 * jax.random.normal(k2, (C, C, 3, 3), jnp.float32)   # conv2 weight
    g1 = 1.0 + 0.1 * jax.random.normal(kg1, (C,), jnp.float32)    # bn1 gamma
    b1 = 0.1 * jax.random.normal(kb1, (C,), jnp.float32)          # bn1 beta
    g2 = 1.0 + 0.1 * jax.random.normal(kg2, (C,), jnp.float32)    # bn2 gamma
    b2 = 0.1 * jax.random.normal(kb2, (C,), jnp.float32)          # bn2 beta

    out = basic_block(x, w1, g1, b1, w2, g2, b2)
    out = jax.block_until_ready(out)

    ref = reference(x, w1, g1, b1, w2, g2, b2)
    assert out.shape == ref.shape == (B, C, H, W)
    max_err = float(jnp.max(jnp.abs(out - ref)))
    assert max_err < 1e-3, f"max abs err {max_err}"
    print("KERNEL_OK")
</pallas_src>

<mosaic_0001>
module attributes {stable_mosaic.version = 11 : i64} {
  func.func @basic_block_kernel(%arg0: memref<16x128xf32, #tpu.memory_space<vmem>>, %arg1: memref<384x128xf32, #tpu.memory_space<vmem>>, %arg2: memref<1x128xf32, #tpu.memory_space<vmem>>, %arg3: memref<1x128xf32, #tpu.memory_space<vmem>>, %arg4: memref<384x128xf32, #tpu.memory_space<vmem>>, %arg5: memref<1x128xf32, #tpu.memory_space<vmem>>, %arg6: memref<1x128xf32, #tpu.memory_space<vmem>>, %arg7: memref<128x128xf32, #tpu.memory_space<vmem>>, %arg8: memref<16x128xf32, #tpu.memory_space<vmem>>) attributes {dimension_semantics = [], scalar_prefetch = 0 : i64, scratch_operands = 0 : i64, tpu.core_type = #tpu.core_type<tc>} {
    %cst = arith.constant 0.000000e+00 : f32
    %0 = vector.broadcast %cst : f32 to vector<1x128xf32>
    %c0 = arith.constant 0 : index
    %c0_0 = arith.constant 0 : index
    %1 = vector.load %arg0[%c0, %c0_0] : memref<16x128xf32, #tpu.memory_space<vmem>>, vector<16x128xf32>
    %2 = vector.extract_strided_slice %1 {offsets = [0, 0], sizes = [15, 128], strides = [1, 1]} : vector<16x128xf32> to vector<15x128xf32>
    %3 = tpu.concatenate %0, %2 in 0 : vector<1x128xf32>, vector<15x128xf32> -> vector<16x128xf32>
    %4 = vector.extract_strided_slice %1 {offsets = [1, 0], sizes = [15, 128], strides = [1, 1]} : vector<16x128xf32> to vector<15x128xf32>
    %5 = tpu.concatenate %4, %0 in 0 : vector<15x128xf32>, vector<1x128xf32> -> vector<16x128xf32>
    %6 = tpu.concatenate %3, %1, %5 in 1 : vector<16x128xf32>, vector<16x128xf32>, vector<16x128xf32> -> vector<16x384xf32>
    %c0_1 = arith.constant 0 : index
    %c0_2 = arith.constant 0 : index
    %7 = vector.load %arg1[%c0_1, %c0_2] : memref<384x128xf32, #tpu.memory_space<vmem>>, vector<384x128xf32>
    %cst_3 = arith.constant dense<0.000000e+00> : vector<16x128xf32>
    %8 = tpu.matmul %6, %7, %cst_3 {dimension_numbers = #tpu.dot_dimension_numbers<[1], [0], [0], [1], [0, 0, 1, 1], [], []>} : vector<16x384xf32>, vector<384x128xf32>, vector<16x128xf32> -> vector<16x128xf32>
    %cst_4 = arith.constant dense<0.000000e+00> : vector<128xf32>
    %9 = vector.multi_reduction <add>, %8, %cst_4 [0] : vector<16x128xf32> to vector<128xf32>
    %10 = vector.shape_cast %9 : vector<128xf32> to vector<1x128xf32>
    %11 = arith.mulf %8, %8 : vector<16x128xf32>
    %cst_5 = arith.constant dense<0.000000e+00> : vector<128xf32>
    %12 = vector.multi_reduction <add>, %11, %cst_5 [0] : vector<16x128xf32> to vector<128xf32>
    %13 = vector.shape_cast %12 : vector<128xf32> to vector<1x128xf32>
    %14 = tpu.concatenate %10, %13 in 0 : vector<1x128xf32>, vector<1x128xf32> -> vector<2x128xf32>
    %c0_6 = arith.constant 0 : index
    %c0_7 = arith.constant 0 : index
    %15 = vector.load %arg7[%c0_6, %c0_7] : memref<128x128xf32, #tpu.memory_space<vmem>>, vector<128x128xf32>
    %cst_8 = arith.constant dense<0.000000e+00> : vector<2x128xf32>
    %16 = tpu.matmul %14, %15, %cst_8 {dimension_numbers = #tpu.dot_dimension_numbers<[1], [0], [0], [1], [0, 0, 1, 1], [], []>} : vector<2x128xf32>, vector<128x128xf32>, vector<2x128xf32> -> vector<2x128xf32>
    %17 = vector.extract_strided_slice %16 {offsets = [0, 0], sizes = [1, 128], strides = [1, 1]} : vector<2x128xf32> to vector<1x128xf32>
    %18 = vector.extract_strided_slice %16 {offsets = [1, 0], sizes = [1, 128], strides = [1, 1]} : vector<2x128xf32> to vector<1x128xf32>
    %19 = arith.mulf %17, %17 : vector<1x128xf32>
    %20 = arith.subf %18, %19 : vector<1x128xf32>
    %21 = vector.broadcast %17 : vector<1x128xf32> to vector<16x128xf32>
    %22 = arith.subf %8, %21 : vector<16x128xf32>
    %cst_9 = arith.constant 9.99999974E-6 : f32
    %23 = vector.broadcast %cst_9 : f32 to vector<1x128xf32>
    %24 = arith.addf %20, %23 : vector<1x128xf32>
    %25 = math.rsqrt %24 : vector<1x128xf32>
    %26 = vector.broadcast %25 : vector<1x128xf32> to vector<16x128xf32>
    %27 = arith.mulf %22, %26 : vector<16x128xf32>
    %c0_10 = arith.constant 0 : index
    %c0_11 = arith.constant 0 : index
    %28 = vector.load %arg2[%c0_10, %c0_11] : memref<1x128xf32, #tpu.memory_space<vmem>>, vector<1x128xf32>
    %29 = vector.broadcast %28 : vector<1x128xf32> to vector<16x128xf32>
    %30 = arith.mulf %27, %29 : vector<16x128xf32>
    %c0_12 = arith.constant 0 : index
    %c0_13 = arith.constant 0 : index
    %31 = vector.load %arg3[%c0_12, %c0_13] : memref<1x128xf32, #tpu.memory_space<vmem>>, vector<1x128xf32>
    %32 = vector.broadcast %31 : vector<1x128xf32> to vector<16x128xf32>
    %33 = arith.addf %30, %32 : vector<16x128xf32>
    %cst_14 = arith.constant 0.000000e+00 : f32
    %34 = vector.broadcast %cst_14 : f32 to vector<16x128xf32>
    %35 = arith.maximumf %33, %34 : vector<16x128xf32>
    %36 = vector.extract_strided_slice %35 {offsets = [0, 0], sizes = [15, 128], strides = [1, 1]} : vector<16x128xf32> to vector<15x128xf32>
    %37 = tpu.concatenate %0, %36 in 0 : vector<1x128xf32>, vector<15x128xf32> -> vector<16x128xf32>
    %38 = vector.extract_strided_slice %35 {offsets = [1, 0], sizes = [15, 128], strides = [1, 1]} : vector<16x128xf32> to vector<15x128xf32>
    %39 = tpu.concatenate %38, %0 in 0 : vector<15x128xf32>, vector<1x128xf32> -> vector<16x128xf32>
    %40 = tpu.concatenate %37, %35, %39 in 1 : vector<16x128xf32>, vector<16x128xf32>, vector<16x128xf32> -> vector<16x384xf32>
    %c0_15 = arith.constant 0 : index
    %c0_16 = arith.constant 0 : index
    %41 = vector.load %arg4[%c0_15, %c0_16] : memref<384x128xf32, #tpu.memory_space<vmem>>, vector<384x128xf32>
    %cst_17 = arith.constant dense<0.000000e+00> : vector<16x128xf32>
    %42 = tpu.matmul %40, %41, %cst_17 {dimension_numbers = #tpu.dot_dimension_numbers<[1], [0], [0], [1], [0, 0, 1, 1], [], []>} : vector<16x384xf32>, vector<384x128xf32>, vector<16x128xf32> -> vector<16x128xf32>
    %cst_18 = arith.constant dense<0.000000e+00> : vector<128xf32>
    %43 = vector.multi_reduction <add>, %42, %cst_18 [0] : vector<16x128xf32> to vector<128xf32>
    %44 = vector.shape_cast %43 : vector<128xf32> to vector<1x128xf32>
    %45 = arith.mulf %42, %42 : vector<16x128xf32>
    %cst_19 = arith.constant dense<0.000000e+00> : vector<128xf32>
    %46 = vector.multi_reduction <add>, %45, %cst_19 [0] : vector<16x128xf32> to vector<128xf32>
    %47 = vector.shape_cast %46 : vector<128xf32> to vector<1x128xf32>
    %48 = tpu.concatenate %44, %47 in 0 : vector<1x128xf32>, vector<1x128xf32> -> vector<2x128xf32>
    %c0_20 = arith.constant 0 : index
    %c0_21 = arith.constant 0 : index
    %49 = vector.load %arg7[%c0_20, %c0_21] : memref<128x128xf32, #tpu.memory_space<vmem>>, vector<128x128xf32>
    %cst_22 = arith.constant dense<0.000000e+00> : vector<2x128xf32>
    %50 = tpu.matmul %48, %49, %cst_22 {dimension_numbers = #tpu.dot_dimension_numbers<[1], [0], [0], [1], [0, 0, 1, 1], [], []>} : vector<2x128xf32>, vector<128x128xf32>, vector<2x128xf32> -> vector<2x128xf32>
    %51 = vector.extract_strided_slice %50 {offsets = [0, 0], sizes = [1, 128], strides = [1, 1]} : vector<2x128xf32> to vector<1x128xf32>
    %52 = vector.extract_strided_slice %50 {offsets = [1, 0], sizes = [1, 128], strides = [1, 1]} : vector<2x128xf32> to vector<1x128xf32>
    %53 = arith.mulf %51, %51 : vector<1x128xf32>
    %54 = arith.subf %52, %53 : vector<1x128xf32>
    %55 = vector.broadcast %51 : vector<1x128xf32> to vector<16x128xf32>
    %56 = arith.subf %42, %55 : vector<16x128xf32>
    %cst_23 = arith.constant 9.99999974E-6 : f32
    %57 = vector.broadcast %cst_23 : f32 to vector<1x128xf32>
    %58 = arith.addf %54, %57 : vector<1x128xf32>
    %59 = math.rsqrt %58 : vector<1x128xf32>
    %60 = vector.broadcast %59 : vector<1x128xf32> to vector<16x128xf32>
    %61 = arith.mulf %56, %60 : vector<16x128xf32>
    %c0_24 = arith.constant 0 : index
    %c0_25 = arith.constant 0 : index
    %62 = vector.load %arg5[%c0_24, %c0_25] : memref<1x128xf32, #tpu.memory_space<vmem>>, vector<1x128xf32>
    %63 = vector.broadcast %62 : vector<1x128xf32> to vector<16x128xf32>
    %64 = arith.mulf %61, %63 : vector<16x128xf32>
    %c0_26 = arith.constant 0 : index
    %c0_27 = arith.constant 0 : index
    %65 = vector.load %arg6[%c0_26, %c0_27] : memref<1x128xf32, #tpu.memory_space<vmem>>, vector<1x128xf32>
    %66 = vector.broadcast %65 : vector<1x128xf32> to vector<16x128xf32>
    %67 = arith.addf %64, %66 : vector<16x128xf32>
    %c0_28 = arith.constant 0 : index
    %c0_29 = arith.constant 0 : index
    %68 = vector.load %arg0[%c0_28, %c0_29] : memref<16x128xf32, #tpu.memory_space<vmem>>, vector<16x128xf32>
    %69 = arith.addf %67, %68 : vector<16x128xf32>
    %cst_30 = arith.constant 0.000000e+00 : f32
    %70 = vector.broadcast %cst_30 : f32 to vector<16x128xf32>
    %71 = arith.maximumf %69, %70 : vector<16x128xf32>
    %c0_31 = arith.constant 0 : index
    %c0_32 = arith.constant 0 : index
    %72 = vector.load %arg8[%c0_31, %c0_32] : memref<16x128xf32, #tpu.memory_space<vmem>>, vector<16x128xf32>
    tpu.vector_store %arg8[%c0_31, %c0_32], %71 {strides = array<i32>} : memref<16x128xf32, #tpu.memory_space<vmem>>, vector<16x128xf32>,
    return
  }
}

</mosaic_0001>

<llo_original>
// kernel: tile.23
$region0: #{tile.23}
  #allocation0 [shape = 's32[1]{0}', space=sflag, size = 0x4, scoped, tag = 'scoped memory for tile.23']
  %s0 = inlined_call_operand.vmem [shape: f32[4], index: 0, kind: input, shape index: {}]
  %s1 = inlined_call_operand.vmem [shape: f32[32,4], index: 1, kind: output, shape index: {}]
  // Predicated region
  $region2: #{tile.23} parent=0 // pred_check
    _
  $region3: #{tile.23} parent=0 // pred_check_branch
    %3 = sbr.rel (0) target = $region5
  $region4: #{tile.23} parent=0 // pred_region
    _
  $region5: #{tile.23} parent=0 // pred_fallthru
    _
  %v4 = vld [vmem:[%s0] ss:$0 sm:$0xff]
  %5 = vst [vmem:[%s1] sm:$0xff] %v4
  %s6 = scalar_lea.vmem %s1, 8
  %7 = vst [vmem:[%s6] sm:$0xff] %v4
  %s8 = scalar_lea.vmem %s1, 16
  %9 = vst [vmem:[%s8] sm:$0xff] %v4
  %s10 = scalar_lea.vmem %s1, 24
  %11 = vst [vmem:[%s10] sm:$0xff] %v4

// kernel: tile.24
$region0: #{tile.24}
  %s0 = inlined_call_operand.vmem [shape: f32[32,4], index: 0, kind: input, shape index: {}]
  %s1 = inlined_call_operand.vmem [shape: f32[1,128], index: 1, kind: output, shape index: {}]
  $region1: #{tile.24} parent=0
    #allocation0 [shape = 'u8[4096]{0}', space=vmem, size = 0x1000, scoped, tag = 'scoped mem for output reshape']
    %v2 = vld [vmem:[%s0] sm:$0x1]
    %vm3 = vcmask 31744
    %4 = vst.msk [vmem:[#allocation0] sm:$0x1] %vm3, %v2
    %s5 = scalar_lea.vmem %s0, 31
    %v6 = vld [vmem:[%s5] sm:$0x1]
    %7 = vrot.lane.b32.xlu0 %v6, 124
    %v8 = vpop.permute.xlu0 %7
    %vm9 = vcmask 1048544
    %10 = vst.msk [vmem:[#allocation0] sm:$0x1] %vm9, %v8
    %s11 = scalar_lea.vmem %s0, 30
    %v12 = vld [vmem:[%s11] sm:$0x1]
    %13 = vrot.lane.b32.xlu0 %v12, 120
    %v14 = vpop.permute.xlu0 %13
    %vm15 = vcmask 1015744
    %16 = vst.msk [vmem:[#allocation0] sm:$0x1] %vm15, %v14
    %s17 = scalar_lea.vmem %s0, 29
    %v18 = vld [vmem:[%s17] sm:$0x1]
    %19 = vrot.lane.b32.xlu0 %v18, 116
    %v20 = vpop.permute.xlu0 %19
    %vm21 = vcmask 982944
    %22 = vst.msk [vmem:[#allocation0] sm:$0x1] %vm21, %v20
    %s23 = scalar_lea.vmem %s0, 28
    %v24 = vld [vmem:[%s23] sm:$0x1]
    %25 = vrot.lane.b32.xlu0 %v24, 112
    %v26 = vpop.permute.xlu0 %25
    %vm27 = vcmask 950144
    %28 = vst.msk [vmem:[#allocation0] sm:$0x1] %vm27, %v26
    %s29 = scalar_lea.vmem %s0, 27
    %v30 = vld [vmem:[%s29] sm:$0x1]
    %31 = vrot.lane.b32.xlu0 %v30, 108
    %v32 = vpop.permute.xlu0 %31
    %vm33 = vcmask 917344
    %34 = vst.msk [vmem:[#allocation0] sm:$0x1] %vm33, %v32
    %s35 = scalar_lea.vmem %s0, 26
    %v36 = vld [vmem:[%s35] sm:$0x1]
    %37 = vrot.lane.b32.xlu0 %v36, 104
    %v38 = vpop.permute.xlu0 %37
    %vm39 = vcmask 884544
    %40 = vst.msk [vmem:[#allocation0] sm:$0x1] %vm39, %v38
    %s41 = scalar_lea.vmem %s0, 25
    %v42 = vld [vmem:[%s41] sm:$0x1]
    %43 = vrot.lane.b32.xlu0 %v42, 100
    %v44 = vpop.permute.xlu0 %43
    %vm45 = vcmask 851744
    %46 = vst.msk [vmem:[#allocation0] sm:$0x1] %vm45, %v44
    %s47 = scalar_lea.vmem %s0, 24
    %v48 = vld [vmem:[%s47] sm:$0x1]
    %49 = vrot.lane.b32.xlu0 %v48, 96
    %v50 = vpop.permute.xlu0 %49
    %vm51 = vcmask 818944
    %52 = vst.msk [vmem:[#allocation0] sm:$0x1] %vm51, %v50
    %s53 = scalar_lea.vmem %s0, 23
    %v54 = vld [vmem:[%s53] sm:$0x1]
    %55 = vrot.lane.b32.xlu0 %v54, 92
    %v56 = vpop.permute.xlu0 %55
    %vm57 = vcmask 786144
    %58 = vst.msk [vmem:[#allocation0] sm:$0x1] %vm57, %v56
    %s59 = scalar_lea.vmem %s0, 22
    %v60 = vld [vmem:[%s59] sm:$0x1]
    %61 = vrot.lane.b32.xlu0 %v60, 88
    %v62 = vpop.permute.xlu0 %61
    %vm63 = vcmask 753344
    %64 = vst.msk [vmem:[#allocation0] sm:$0x1] %vm63, %v62
    %s65 = scalar_lea.vmem %s0, 21
    %v66 = vld [vmem:[%s65] sm:$0x1]
    %67 = vrot.lane.b32.xlu0 %v66, 84
    %v68 = vpop.permute.xlu0 %67
    %vm69 = vcmask 720544
    %70 = vst.msk [vmem:[#allocation0] sm:$0x1] %vm69, %v68
    %s71 = scalar_lea.vmem %s0, 20
    %v72 = vld [vmem:[%s71] sm:$0x1]
    %73 = vrot.lane.b32.xlu0 %v72, 80
    %v74 = vpop.permute.xlu0 %73
    %vm75 = vcmask 687744
    %76 = vst.msk [vmem:[#allocation0] sm:$0x1] %vm75, %v74
    %s77 = scalar_lea.vmem %s0, 19
    %v78 = vld [vmem:[%s77] sm:$0x1]
    %79 = vrot.lane.b32.xlu0 %v78, 76
    %v80 = vpop.permute.xlu0 %79
    %vm81 = vcmask 654944
    %82 = vst.msk [vmem:[#allocation0] sm:$0x1] %vm81, %v80
    %s83 = scalar_lea.vmem %s0, 18
    %v84 = vld [vmem:[%s83] sm:$0x1]
    %85 = vrot.lane.b32.xlu0 %v84, 72
    %v86 = vpop.permute.xlu0 %85
    %vm87 = vcmask 622144
    %88 = vst.msk [vmem:[#allocation0] sm:$0x1] %vm87, %v86
    %s89 = scalar_lea.vmem %s0, 17
    %v90 = vld [vmem:[%s89] sm:$0x1]
    %91 = vrot.lane.b32.xlu0 %v90, 68
    %v92 = vpop.permute.xlu0 %91
    %vm93 = vcmask 589344
    %94 = vst.msk [vmem:[#allocation0] sm:$0x1] %vm93, %v92
    %s95 = scalar_lea.vmem %s0, 16
    %v96 = vld [vmem:[%s95] sm:$0x1]
    %97 = vrot.lane.b32.xlu0 %v96, 64
    %v98 = vpop.permute.xlu0 %97
    %vm99 = vcmask 556544
    %100 = vst.msk [vmem:[#allocation0] sm:$0x1] %vm99, %v98
    %s101 = scalar_lea.vmem %s0, 15
    %v102 = vld [vmem:[%s101] sm:$0x1]
    %103 = vrot.lane.b32.xlu0 %v102, 60
    %v104 = vpop.permute.xlu0 %103
    %vm105 = vcmask 523744
    %106 = vst.msk [vmem:[#allocation0] sm:$0x1] %vm105, %v104
    %s107 = scalar_lea.vmem %s0, 14
    %v108 = vld [vmem:[%s107] sm:$0x1]
    %109 = vrot.lane.b32.xlu0 %v108, 56
    %v110 = vpop.permute.xlu0 %109
    %vm111 = vcmask 490944
    %112 = vst.msk [vmem:[#allocation0] sm:$0x1] %vm111, %v110
    %s113 = scalar_lea.vmem %s0, 13
    %v114 = vld [vmem:[%s113] sm:$0x1]
    %115 = vrot.lane.b32.xlu0 %v114, 52
    %v116 = vpop.permute.xlu0 %115
    %vm117 = vcmask 458144
    %118 = vst.msk [vmem:[#allocation0] sm:$0x1] %vm117, %v116
    %s119 = scalar_lea.vmem %s0, 12
    %v120 = vld [vmem:[%s119] sm:$0x1]
    %121 = vrot.lane.b32.xlu0 %v120, 48
    %v122 = vpop.permute.xlu0 %121
    %vm123 = vcmask 425344
    %124 = vst.msk [vmem:[#allocation0] sm:$0x1] %vm123, %v122
    %s125 = scalar_lea.vmem %s0, 11
    %v126 = vld [vmem:[%s125] sm:$0x1]
    %127 = vrot.lane.b32.xlu0 %v126, 44
    %v128 = vpop.permute.xlu0 %127
    %vm129 = vcmask 392544
    %130 = vst.msk [vmem:[#allocation0] sm:$0x1] %vm129, %v128
    %s131 = scalar_lea.vmem %s0, 10
    %v132 = vld [vmem:[%s131] sm:$0x1]
    %133 = vrot.lane.b32.xlu0 %v132, 40
    %v134 = vpop.permute.xlu0 %133
    %vm135 = vcmask 359744
    %136 = vst.msk [vmem:[#allocation0] sm:$0x1] %vm135, %v134
    %s137 = scalar_lea.vmem %s0, 9
    %v138 = vld [vmem:[%s137] sm:$0x1]
    %139 = vrot.lane.b32.xlu0 %v138, 36
    %v140 = vpop.permute.xlu0 %139
    %vm141 = vcmask 326944
    %142 = vst.msk [vmem:[#allocation0] sm:$0x1] %vm141, %v140
    %s143 = scalar_lea.vmem %s0, 8
    %v144 = vld [vmem:[%s143] sm:$0x1]
    %145 = vrot.lane.b32.xlu0 %v144, 32
    %v146 = vpop.permute.xlu0 %145
    %vm147 = vcmask 294144
    %148 = vst.msk [vmem:[#allocation0] sm:$0x1] %vm147, %v146
    %s149 = scalar_lea.vmem %s0, 7
    %v150 = vld [vmem:[%s149] sm:$0x1]
    %151 = vrot.lane.b32.xlu0 %v150, 28
    %v152 = vpop.permute.xlu0 %151
    %vm153 = vcmask 261344
    %154 = vst.msk [vmem:[#allocation0] sm:$0x1] %vm153, %v152
    %s155 = scalar_lea.vmem %s0, 6
    %v156 = vld [vmem:[%s155] sm:$0x1]
    %157 = vrot.lane.b32.xlu0 %v156, 24
    %v158 = vpop.permute.xlu0 %157
    %vm159 = vcmask 228544
    %160 = vst.msk [vmem:[#allocation0] sm:$0x1] %vm159, %v158
    %s161 = scalar_lea.vmem %s0, 5
    %v162 = vld [vmem:[%s161] sm:$0x1]
    %163 = vrot.lane.b32.xlu0 %v162, 20
    %v164 = vpop.permute.xlu0 %163
    %vm165 = vcmask 195744
    %166 = vst.msk [vmem:[#allocation0] sm:$0x1] %vm165, %v164
    %s167 = scalar_lea.vmem %s0, 4
    %v168 = vld [vmem:[%s167] sm:$0x1]
    %169 = vrot.lane.b32.xlu0 %v168, 16
    %v170 = vpop.permute.xlu0 %169
    %vm171 = vcmask 162944
    %172 = vst.msk [vmem:[#allocation0] sm:$0x1] %vm171, %v170
    %s173 = scalar_lea.vmem %s0, 3
    %v174 = vld [vmem:[%s173] sm:$0x1]
    %175 = vrot.lane.b32.xlu0 %v174, 12
    %v176 = vpop.permute.xlu0 %175
    %vm177 = vcmask 130144
    %178 = vst.msk [vmem:[#allocation0] sm:$0x1] %vm177, %v176
    %s179 = scalar_lea.vmem %s0, 2
    %v180 = vld [vmem:[%s179] sm:$0x1]
    %181 = vrot.lane.b32.xlu0 %v180, 8
    %v182 = vpop.permute.xlu0 %181
    %vm183 = vcmask 97344
    %184 = vst.msk [vmem:[#allocation0] sm:$0x1] %vm183, %v182
    %s185 = scalar_lea.vmem %s0, 1
    %v186 = vld [vmem:[%s185] sm:$0x1]
    %187 = vrot.lane.b32.xlu0 %v186, 4
    %v188 = vpop.permute.xlu0 %187
    %vm189 = vcmask 64544
    %190 = vst.msk [vmem:[#allocation0] sm:$0x1] %vm189, %v188
    %s192 = sshllo.u32 0, 1
    %v194 = vld [vmem:[#allocation0] sm:%s192]
    %s195 = sshllo.u32 0, 1
    %196 = vst [vmem:[%s1] sm:%s195] %v194

// kernel: basic_block.1
$region0: #{basic_block.1}
  #allocation0 [shape = 'u32[]', space=smem, size = 0x4, offset = 0x4, fixed_abs, tag = 'smem constant byte address 0x4 - core index']
  #allocation1 [shape = 'u32[144,128]{1,0:T(1,128)}', space=vmem, size = 0x12000, scoped, tag = 'internal scratch']
  %s0 = inlined_call_operand.vmem [shape: f32[16,128], index: 0, kind: input, shape index: {}]
  %s1 = inlined_call_operand.vmem [shape: f32[384,128], index: 1, kind: input, shape index: {}]
  %s2 = inlined_call_operand.vmem [shape: f32[1,128], index: 2, kind: input, shape index: {}]
  %s3 = inlined_call_operand.vmem [shape: f32[1,128], index: 3, kind: input, shape index: {}]
  %s4 = inlined_call_operand.vmem [shape: f32[384,128], index: 4, kind: input, shape index: {}]
  %s5 = inlined_call_operand.vmem [shape: f32[1,128], index: 5, kind: input, shape index: {}]
  %s6 = inlined_call_operand.vmem [shape: f32[1,128], index: 6, kind: input, shape index: {}]
  %s7 = inlined_call_operand.vmem [shape: f32[128,128], index: 7, kind: input, shape index: {}]
  %s8 = inlined_call_operand.vmem [shape: f32[16,128], index: 8, kind: output, shape index: {}]
  %s9 = sld [smem:[#allocation0]]
  $region42: #{basic_block.1} parent=0
    _
  %s11 = ssub.s32 1, %s9
  %s12 = scalar_select 0, %s11, %s9
  // Predicated region
  $region2: #{basic_block.1} parent=0 // pred_check
    _
  $region3: #{basic_block.1} parent=0 // pred_check_branch
    %14 = sbr.rel (0) target = $region5
  $region4: #{basic_block.1} parent=0 // pred_region
    _
  $region5: #{basic_block.1} parent=0 // pred_fallthru
    _
  // Predicated region
  $region6: #{basic_block.1} parent=0 // pred_check
    _
  $region7: #{basic_block.1} parent=0 // pred_check_branch
    %16 = sbr.rel (0) target = $region9
  $region8: #{basic_block.1} parent=0 // pred_region
    _
  $region9: #{basic_block.1} parent=0 // pred_fallthru
    _
  // Predicated region
  $region10: #{basic_block.1} parent=0 // pred_check
    _
  $region11: #{basic_block.1} parent=0 // pred_check_branch
    %18 = sbr.rel (0) target = $region13
  $region12: #{basic_block.1} parent=0 // pred_region
    _
  $region13: #{basic_block.1} parent=0 // pred_fallthru
    _
  // Predicated region
  $region14: #{basic_block.1} parent=0 // pred_check
    _
  $region15: #{basic_block.1} parent=0 // pred_check_branch
    %20 = sbr.rel (0) target = $region17
  $region16: #{basic_block.1} parent=0 // pred_region
    _
  $region17: #{basic_block.1} parent=0 // pred_fallthru
    _
  // Predicated region
  $region18: #{basic_block.1} parent=0 // pred_check
    _
  $region19: #{basic_block.1} parent=0 // pred_check_branch
    %22 = sbr.rel (0) target = $region21
  $region20: #{basic_block.1} parent=0 // pred_region
    _
  $region21: #{basic_block.1} parent=0 // pred_fallthru
    _
  // Predicated region
  $region22: #{basic_block.1} parent=0 // pred_check
    _
  $region23: #{basic_block.1} parent=0 // pred_check_branch
    %24 = sbr.rel (0) target = $region25
  $region24: #{basic_block.1} parent=0 // pred_region
    _
  $region25: #{basic_block.1} parent=0 // pred_fallthru
    _
  // Predicated region
  $region26: #{basic_block.1} parent=0 // pred_check
    _
  $region27: #{basic_block.1} parent=0 // pred_check_branch
    %26 = sbr.rel (0) target = $region29
  $region28: #{basic_block.1} parent=0 // pred_region
    _
  $region29: #{basic_block.1} parent=0 // pred_fallthru
    _
  // Predicated region
  $region30: #{basic_block.1} parent=0 // pred_check
    _
  $region31: #{basic_block.1} parent=0 // pred_check_branch
    %28 = sbr.rel (0) target = $region33
  $region32: #{basic_block.1} parent=0 // pred_region
    _
  $region33: #{basic_block.1} parent=0 // pred_fallthru
    _
  %v29 = vld [vmem:[%s0] sm:$0xff]
  %v30 = vld [vmem:[%s0 + $0x8] sm:$0xff]
  %vm33 = vcmask 1040384
  %v34 = vrot.slane %v29, 7
  %v35 = vrot.slane %v30, 7
  %v36 = vsel %vm33, %v34, %v35
  %v39 = vsel %vm33, 0.0, %v34
  %vm40 = vcmask 1046528
  %v41 = vrot.slane %v29, 1
  %v42 = vrot.slane %v30, 1
  %v43 = vsel %vm40, %v41, %v42
  %v46 = vsel %vm40, %v42, 0.0
  %v47 = vld [vmem:[%s1] sm:$0xff]
  %v48 = vld [vmem:[%s1 + $0x8] sm:$0xff]
  %v49 = vld [vmem:[%s1 + $0x10] sm:$0xff]
  %v50 = vld [vmem:[%s1 + $0x18] sm:$0xff]
  %v51 = vld [vmem:[%s1 + $0x20] sm:$0xff]
  %v52 = vld [vmem:[%s1 + $0x28] sm:$0xff]
  %v53 = vld [vmem:[%s1 + $0x30] sm:$0xff]
  %v54 = vld [vmem:[%s1 + $0x38] sm:$0xff]
  %v55 = vld [vmem:[%s1 + $0x40] sm:$0xff]
  %v56 = vld [vmem:[%s1 + $0x48] sm:$0xff]
  %v57 = vld [vmem:[%s1 + $0x50] sm:$0xff]
  %v58 = vld [vmem:[%s1 + $0x58] sm:$0xff]
  %v59 = vld [vmem:[%s1 + $0x60] sm:$0xff]
  %v60 = vld [vmem:[%s1 + $0x68] sm:$0xff]
  %v61 = vld [vmem:[%s1 + $0x70] sm:$0xff]
  %v62 = vld [vmem:[%s1 + $0x78] sm:$0xff]
  %v63 = vld [vmem:[%s1 + $0x80] sm:$0xff]
  %v64 = vld [vmem:[%s1 + $0x88] sm:$0xff]
  %v65 = vld [vmem:[%s1 + $0x90] sm:$0xff]
  %v66 = vld [vmem:[%s1 + $0x98] sm:$0xff]
  %v67 = vld [vmem:[%s1 + $0xa0] sm:$0xff]
  %v68 = vld [vmem:[%s1 + $0xa8] sm:$0xff]
  %v69 = vld [vmem:[%s1 + $0xb0] sm:$0xff]
  %v70 = vld [vmem:[%s1 + $0xb8] sm:$0xff]
  %v71 = vld [vmem:[%s1 + $0xc0] sm:$0xff]
  %v72 = vld [vmem:[%s1 + $0xc8] sm:$0xff]
  %v73 = vld [vmem:[%s1 + $0xd0] sm:$0xff]
  %v74 = vld [vmem:[%s1 + $0xd8] sm:$0xff]
  %v75 = vld [vmem:[%s1 + $0xe0] sm:$0xff]
  %v76 = vld [vmem:[%s1 + $0xe8] sm:$0xff]
  %v77 = vld [vmem:[%s1 + $0xf0] sm:$0xff]
  %v78 = vld [vmem:[%s1 + $0xf8] sm:$0xff]
  %v79 = vld [vmem:[%s1 + $0x100] sm:$0xff]
  %v80 = vld [vmem:[%s1 + $0x108] sm:$0xff]
  %v81 = vld [vmem:[%s1 + $0x110] sm:$0xff]
  %v82 = vld [vmem:[%s1 + $0x118] sm:$0xff]
  %v83 = vld [vmem:[%s1 + $0x120] sm:$0xff]
  %v84 = vld [vmem:[%s1 + $0x128] sm:$0xff]
  %v85 = vld [vmem:[%s1 + $0x130] sm:$0xff]
  %v86 = vld [vmem:[%s1 + $0x138] sm:$0xff]
  %v87 = vld [vmem:[%s1 + $0x140] sm:$0xff]
  %v88 = vld [vmem:[%s1 + $0x148] sm:$0xff]
  %v89 = vld [vmem:[%s1 + $0x150] sm:$0xff]
  %v90 = vld [vmem:[%s1 + $0x158] sm:$0xff]
  %v91 = vld [vmem:[%s1 + $0x160] sm:$0xff]
  %v92 = vld [vmem:[%s1 + $0x168] sm:$0xff]
  %v93 = vld [vmem:[%s1 + $0x170] sm:$0xff]
  %v94 = vld [vmem:[%s1 + $0x178] sm:$0xff]
  %95 = vmatprep.subr.mxu0 0.0
  %96 = vmatpush1.msra.mxu0 %v47
  %97 = vmatprep.subr.mxu0 0.0
  %98 = vmatpush1.msra.mxu0 %v48
  %99 = vmatprep.subr.mxu0 0.0
  %100 = vmatpush1.msra.mxu0 %v49
  %101 = vmatprep.subr.mxu0 0.0
  %102 = vmatpush1.msra.mxu0 %v50
  %103 = vmatprep.subr.mxu0 0.0
  %104 = vmatpush1.msra.mxu0 %v51
  %105 = vmatprep.subr.mxu0 0.0
  %106 = vmatpush1.msra.mxu0 %v52
  %107 = vmatprep.subr.mxu0 0.0
  %108 = vmatpush1.msra.mxu0 %v53
  %109 = vmatprep.subr.mxu0 0.0
  %110 = vmatpush1.msra.mxu0 %v54
  %111 = vmatprep.subr.mxu0 0.0
  %112 = vmatpush1.msra.mxu0 %v55
  %113 = vmatprep.subr.mxu0 0.0
  %114 = vmatpush1.msra.mxu0 %v56
  %115 = vmatprep.subr.mxu0 0.0
  %116 = vmatpush1.msra.mxu0 %v57
  %117 = vmatprep.subr.mxu0 0.0
  %118 = vmatpush1.msra.mxu0 %v58
  %119 = vmatprep.subr.mxu0 0.0
  %120 = vmatpush1.msra.mxu0 %v59
  %121 = vmatprep.subr.mxu0 0.0
  %122 = vmatpush1.msra.mxu0 %v60
  %123 = vmatprep.subr.mxu0 0.0
  %124 = vmatpush1.msra.mxu0 %v61
  %125 = vmatprep.subr.mxu0 0.0
  %126 = vmatpush1.msra.mxu0 %v62
  %127 = vmatprep.subr.mxu0 0.0
  %128 = vmatpush1.msra.mxu0 %v63
  %129 = vmatprep.subr.mxu0 0.0
  %130 = vmatpush1.msra.mxu0 %v64
  %131 = vmatprep.subr.mxu0 0.0
  %132 = vmatpush1.msra.mxu0 %v65
  %133 = vmatprep.subr.mxu0 0.0
  %134 = vmatpush1.msra.mxu0 %v66
  %135 = vmatprep.subr.mxu0 0.0
  %136 = vmatpush1.msra.mxu0 %v67
  %137 = vmatprep.subr.mxu0 0.0
  %138 = vmatpush1.msra.mxu0 %v68
  %139 = vmatprep.subr.mxu0 0.0
  %140 = vmatpush1.msra.mxu0 %v69
  %141 = vmatprep.subr.mxu0 0.0
  %142 = vmatpush1.msra.mxu0 %v70
  %143 = vmatprep.subr.mxu0 0.0
  %144 = vmatpush1.msra.mxu0 %v71
  %145 = vmatprep.subr.mxu0 0.0
  %146 = vmatpush1.msra.mxu0 %v72
  %147 = vmatprep.subr.mxu0 0.0
  %148 = vmatpush1.msra.mxu0 %v73
  %149 = vmatprep.subr.mxu0 0.0
  %150 = vmatpush1.msra.mxu0 %v74
  %151 = vmatprep.subr.mxu0 0.0
  %152 = vmatpush1.msra.mxu0 %v75
  %153 = vmatprep.subr.mxu0 0.0
  %154 = vmatpush1.msra.mxu0 %v76
  %155 = vmatprep.subr.mxu0 0.0
  %156 = vmatpush1.msra.mxu0 %v77
  %157 = vmatprep.subr.mxu0 0.0
  %158 = vmatpush1.msra.mxu0 %v78
  %159 = vmatprep.mubr.f32.mxu0 %v29
  %160 = vmatmul.mubr.f32.gmra.mrb[0].mxu0 %v39
  %v161 = vpop.f32.mrb[0].mxu0
  %v162 = vadd.f32 0.0, %v161
  %v163 = vpop.f32.mrb[0].mxu0
  %164 = vmatprep.mubr.f32.mxu0 %v30
  %165 = vmatmul.mubr.f32.gmra.mrb[0].mxu0 %v36
  %v166 = vpop.f32.mrb[0].mxu0
  %v167 = vadd.f32 0.0, %v166
  %v168 = vpop.f32.mrb[0].mxu0
  %169 = vdwg.mxu0
  %170 = vmatprep.subr.mxu0 0.0
  %171 = vmatpush1.msra.mxu0 %v79
  %172 = vmatprep.subr.mxu0 0.0
  %173 = vmatpush1.msra.mxu0 %v80
  %174 = vmatprep.subr.mxu0 0.0
  %175 = vmatpush1.msra.mxu0 %v81
  %176 = vmatprep.subr.mxu0 0.0
  %177 = vmatpush1.msra.mxu0 %v82
  %178 = vmatprep.subr.mxu0 0.0
  %179 = vmatpush1.msra.mxu0 %v83
  %180 = vmatprep.subr.mxu0 0.0
  %181 = vmatpush1.msra.mxu0 %v84
  %182 = vmatprep.subr.mxu0 0.0
  %183 = vmatpush1.msra.mxu0 %v85
  %184 = vmatprep.subr.mxu0 0.0
  %185 = vmatpush1.msra.mxu0 %v86
  %186 = vmatprep.subr.mxu0 0.0
  %187 = vmatpush1.msra.mxu0 %v87
  %188 = vmatprep.subr.mxu0 0.0
  %189 = vmatpush1.msra.mxu0 %v88
  %190 = vmatprep.subr.mxu0 0.0
  %191 = vmatpush1.msra.mxu0 %v89
  %192 = vmatprep.subr.mxu0 0.0
  %193 = vmatpush1.msra.mxu0 %v90
  %194 = vmatprep.subr.mxu0 0.0
  %195 = vmatpush1.msra.mxu0 %v91
  %196 = vmatprep.subr.mxu0 0.0
  %197 = vmatpush1.msra.mxu0 %v92
  %198 = vmatprep.subr.mxu0 0.0
  %199 = vmatpush1.msra.mxu0 %v93
  %200 = vmatprep.subr.mxu0 0.0
  %201 = vmatpush1.msra.mxu0 %v94
  %202 = vmatprep.subr.mxu0 0.0
  %203 = vmatpush1.msra.mxu0 0.0
  %204 = vmatprep.subr.mxu0 0.0
  %205 = vmatpush1.msra.mxu0 0.0
  %206 = vmatprep.subr.mxu0 0.0
  %207 = vmatpush1.msra.mxu0 0.0
  %208 = vmatprep.subr.mxu0 0.0
  %209 = vmatpush1.msra.mxu0 0.0
  %210 = vmatprep.subr.mxu0 0.0
  %211 = vmatpush1.msra.mxu0 0.0
  %212 = vmatprep.subr.mxu0 0.0
  %213 = vmatpush1.msra.mxu0 0.0
  %214 = vmatprep.subr.mxu0 0.0
  %215 = vmatpush1.msra.mxu0 0.0
  %216 = vmatprep.subr.mxu0 0.0
  %217 = vmatpush1.msra.mxu0 0.0
  %218 = vmatprep.subr.mxu0 0.0
  %219 = vmatpush1.msra.mxu0 0.0
  %220 = vmatprep.subr.mxu0 0.0
  %221 = vmatpush1.msra.mxu0 0.0
  %222 = vmatprep.subr.mxu0 0.0
  %223 = vmatpush1.msra.mxu0 0.0
  %224 = vmatprep.subr.mxu0 0.0
  %225 = vmatpush1.msra.mxu0 0.0
  %226 = vmatprep.subr.mxu0 0.0
  %227 = vmatpush1.msra.mxu0 0.0
  %228 = vmatprep.subr.mxu0 0.0
  %229 = vmatpush1.msra.mxu0 0.0
  %230 = vmatprep.subr.mxu0 0.0
  %231 = vmatpush1.msra.mxu0 0.0
  %232 = vmatprep.subr.mxu0 0.0
  %233 = vmatpush1.msra.mxu0 0.0
  %234 = vmatprep.mubr.f32.mxu0 0.0
  %235 = vmatmul.mubr.f32.gmra.mrb[0].mxu0 %v43
  %v236 = vpop.f32.mrb[0].mxu0
  %v237 = vadd.f32 %v162, %v236
  %v238 = vpop.f32.mrb[0].mxu0
  %239 = vmatprep.mubr.f32.mxu0 0.0
  %240 = vmatmul.mubr.f32.gmra.mrb[0].mxu0 %v46
  %v241 = vpop.f32.mrb[0].mxu0
  %v242 = vadd.f32 %v167, %v241
  %v243 = vpop.f32.mrb[0].mxu0
  %244 = vdwg.mxu0
  %v245 = vadd.f32 %v237, %v242
  %v246 = vrot.slane %v245, 4
  %v247 = vadd.f32 %v245, %v246
  %v248 = vrot.slane %v247, 2
  %v249 = vadd.f32 %v247, %v248
  %v250 = vrot.slane %v249, 1
  %v251 = vadd.f32 %v249, %v250
  %v252 = vmul.f32 %v237, %v237
  %v253 = vmul.f32 %v242, %v242
  %v254 = vadd.f32 %v252, %v253
  %v255 = vrot.slane %v254, 4
  %v256 = vadd.f32 %v254, %v255
  %v257 = vrot.slane %v256, 2
  %v258 = vadd.f32 %v256, %v257
  %v259 = vrot.slane %v258, 1
  %v260 = vadd.f32 %v258, %v259
  %v261 = vsel %vm33, %v251, %v260
  %v262 = vld [vmem:[%s7] sm:$0xff]
  %v263 = vld [vmem:[%s7 + $0x8] sm:$0xff]
  %v264 = vld [vmem:[%s7 + $0x10] sm:$0xff]
  %v265 = vld [vmem:[%s7 + $0x18] sm:$0xff]
  %v266 = vld [vmem:[%s7 + $0x20] sm:$0xff]
  %v267 = vld [vmem:[%s7 + $0x28] sm:$0xff]
  %v268 = vld [vmem:[%s7 + $0x30] sm:$0xff]
  %v269 = vld [vmem:[%s7 + $0x38] sm:$0xff]
  %v270 = vld [vmem:[%s7 + $0x40] sm:$0xff]
  %v271 = vld [vmem:[%s7 + $0x48] sm:$0xff]
  %v272 = vld [vmem:[%s7 + $0x50] sm:$0xff]
  %v273 = vld [vmem:[%s7 + $0x58] sm:$0xff]
  %v274 = vld [vmem:[%s7 + $0x60] sm:$0xff]
  %v275 = vld [vmem:[%s7 + $0x68] sm:$0xff]
  %v276 = vld [vmem:[%s7 + $0x70] sm:$0xff]
  %v277 = vld [vmem:[%s7 + $0x78] sm:$0xff]
  %278 = vmatprep.subr.mxu0 0.0
  %279 = vmatpush1.msra.mxu0 %v262
  %280 = vmatprep.subr.mxu0 0.0
  %281 = vmatpush1.msra.mxu0 %v263
  %282 = vmatprep.subr.mxu0 0.0
  %283 = vmatpush1.msra.mxu0 %v264
  %284 = vmatprep.subr.mxu0 0.0
  %285 = vmatpush1.msra.mxu0 %v265
  %286 = vmatprep.subr.mxu0 0.0
  %287 = vmatpush1.msra.mxu0 %v266
  %288 = vmatprep.subr.mxu0 0.0
  %289 = vmatpush1.msra.mxu0 %v267
  %290 = vmatprep.subr.mxu0 0.0
  %291 = vmatpush1.msra.mxu0 %v268
  %292 = vmatprep.subr.mxu0 0.0
  %293 = vmatpush1.msra.mxu0 %v269
  %294 = vmatprep.subr.mxu0 0.0
  %295 = vmatpush1.msra.mxu0 %v270
  %296 = vmatprep.subr.mxu0 0.0
  %297 = vmatpush1.msra.mxu0 %v271
  %298 = vmatprep.subr.mxu0 0.0
  %299 = vmatpush1.msra.mxu0 %v272
  %300 = vmatprep.subr.mxu0 0.0
  %301 = vmatpush1.msra.mxu0 %v273
  %302 = vmatprep.subr.mxu0 0.0
  %303 = vmatpush1.msra.mxu0 %v274
  %304 = vmatprep.subr.mxu0 0.0
  %305 = vmatpush1.msra.mxu0 %v275
  %306 = vmatprep.subr.mxu0 0.0
  %307 = vmatpush1.msra.mxu0 %v276
  %308 = vmatprep.subr.mxu0 0.0
  %309 = vmatpush1.msra.mxu0 %v277
  %310 = vmatprep.subr.mxu0 0.0
  %311 = vmatpush1.msra.mxu0 0.0
  %312 = vmatprep.subr.mxu0 0.0
  %313 = vmatpush1.msra.mxu0 0.0
  %314 = vmatprep.subr.mxu0 0.0
  %315 = vmatpush1.msra.mxu0 0.0
  %316 = vmatprep.subr.mxu0 0.0
  %317 = vmatpush1.msra.mxu0 0.0
  %318 = vmatprep.subr.mxu0 0.0
  %319 = vmatpush1.msra.mxu0 0.0
  %320 = vmatprep.subr.mxu0 0.0
  %321 = vmatpush1.msra.mxu0 0.0
  %322 = vmatprep.subr.mxu0 0.0
  %323 = vmatpush1.msra.mxu0 0.0
  %324 = vmatprep.subr.mxu0 0.0
  %325 = vmatpush1.msra.mxu0 0.0
  %326 = vmatprep.subr.mxu0 0.0
  %327 = vmatpush1.msra.mxu0 0.0
  %328 = vmatprep.subr.mxu0 0.0
  %329 = vmatpush1.msra.mxu0 0.0
  %330 = vmatprep.subr.mxu0 0.0
  %331 = vmatpush1.msra.mxu0 0.0
  %332 = vmatprep.subr.mxu0 0.0
  %333 = vmatpush1.msra.mxu0 0.0
  %334 = vmatprep.subr.mxu0 0.0
  %335 = vmatpush1.msra.mxu0 0.0
  %336 = vmatprep.subr.mxu0 0.0
  %337 = vmatpush1.msra.mxu0 0.0
  %338 = vmatprep.subr.mxu0 0.0
  %339 = vmatpush1.msra.mxu0 0.0
  %340 = vmatprep.subr.mxu0 0.0
  %341 = vmatpush1.msra.mxu0 0.0
  %342 = vmatprep.mubr.f32.mxu0 0.0
  %343 = vmatmul.mubr.f32.gmra.mrb[0].mxu0 %v261
  %v344 = vpop.f32.mrb[0].mxu0
  %v345 = vadd.f32 0.0, %v344
  %v346 = vpop.f32.mrb[0].mxu0
  %347 = vdwg.mxu0
  %v348 = vmul.f32 %v345, %v345
  %v350 = vrot.slane %v348, 7
  %v352 = vsub.f32 %v345, %v350
  %v353 = vlaneseq
  %v354 = vshrl.u32 %v353, 7
  %v355 = vsub.s32 0, %v354
  %v356 = vrot.slane %v345, %v355
  %v357 = vsub.f32 %v237, %v356
  %v358 = vsub.f32 %v242, %v356
  %v359 = vadd.f32 %v352, 1e-05
  %v360 = vrsqrt.pop %v359
  %v361 = vlaneseq
  %v362 = vshrl.u32 %v361, 7
  %v363 = vsub.s32 1, %v362
  %v364 = vrot.slane %v360, %v363
  %v365 = vmul.f32 %v357, %v364
  %v366 = vmul.f32 %v358, %v364
  %v367 = vld [vmem:[%s2] sm:$0x1]
  %v369 = vlaneseq
  %v370 = vshrl.u32 %v369, 7
  %v371 = vsub.s32 0, %v370
  %v372 = vrot.slane %v367, %v371
  %v374 = vmul.f32 %v365, %v372
  %v375 = vmul.f32 %v366, %v372
  %v376 = vld [vmem:[%s3] sm:$0x1]
  %v378 = vlaneseq
  %v379 = vshrl.u32 %v378, 7
  %v380 = vsub.s32 0, %v379
  %v381 = vrot.slane %v376, %v380
  %v383 = vadd.f32 %v374, %v381
  %v384 = vadd.f32 %v375, %v381
  %v385 = vmax.f32 %v383, 0.0
  %v386 = vmax.f32 %v384, 0.0
  %v389 = vrot.slane %v385, 7
  %v390 = vrot.slane %v386, 7
  %v391 = vsel %vm33, %v389, %v390
  %v394 = vsel %vm33, 0.0, %v389
  %v395 = vrot.slane %v385, 1
  %v396 = vrot.slane %v386, 1
  %v397 = vsel %vm40, %v395, %v396
  %v400 = vsel %vm40, %v396, 0.0
  %v401 = vld [vmem:[%s4] sm:$0xff]
  %v402 = vld [vmem:[%s4 + $0x8] sm:$0xff]
  %v403 = vld [vmem:[%s4 + $0x10] sm:$0xff]
  %v404 = vld [vmem:[%s4 + $0x18] sm:$0xff]
  %v405 = vld [vmem:[%s4 + $0x20] sm:$0xff]
  %v406 = vld [vmem:[%s4 + $0x28] sm:$0xff]
  %v407 = vld [vmem:[%s4 + $0x30] sm:$0xff]
  %v408 = vld [vmem:[%s4 + $0x38] sm:$0xff]
  %v409 = vld [vmem:[%s4 + $0x40] sm:$0xff]
  %v410 = vld [vmem:[%s4 + $0x48] sm:$0xff]
  %v411 = vld [vmem:[%s4 + $0x50] sm:$0xff]
  %v412 = vld [vmem:[%s4 + $0x58] sm:$0xff]
  %v413 = vld [vmem:[%s4 + $0x60] sm:$0xff]
  %v414 = vld [vmem:[%s4 + $0x68] sm:$0xff]
  %v415 = vld [vmem:[%s4 + $0x70] sm:$0xff]
  %v416 = vld [vmem:[%s4 + $0x78] sm:$0xff]
  %v417 = vld [vmem:[%s4 + $0x80] sm:$0xff]
  %v418 = vld [vmem:[%s4 + $0x88] sm:$0xff]
  %v419 = vld [vmem:[%s4 + $0x90] sm:$0xff]
  %v420 = vld [vmem:[%s4 + $0x98] sm:$0xff]
  %v421 = vld [vmem:[%s4 + $0xa0] sm:$0xff]
  %v422 = vld [vmem:[%s4 + $0xa8] sm:$0xff]
  %v423 = vld [vmem:[%s4 + $0xb0] sm:$0xff]
  %v424 = vld [vmem:[%s4 + $0xb8] sm:$0xff]
  %v425 = vld [vmem:[%s4 + $0xc0] sm:$0xff]
  %v426 = vld [vmem:[%s4 + $0xc8] sm:$0xff]
  %v427 = vld [vmem:[%s4 + $0xd0] sm:$0xff]
  %v428 = vld [vmem:[%s4 + $0xd8] sm:$0xff]
  %v429 = vld [vmem:[%s4 + $0xe0] sm:$0xff]
  %v430 = vld [vmem:[%s4 + $0xe8] sm:$0xff]
  %v431 = vld [vmem:[%s4 + $0xf0] sm:$0xff]
  %v432 = vld [vmem:[%s4 + $0xf8] sm:$0xff]
  %v433 = vld [vmem:[%s4 + $0x100] sm:$0xff]
  %v434 = vld [vmem:[%s4 + $0x108] sm:$0xff]
  %v435 = vld [vmem:[%s4 + $0x110] sm:$0xff]
  %v436 = vld [vmem:[%s4 + $0x118] sm:$0xff]
  %v437 = vld [vmem:[%s4 + $0x120] sm:$0xff]
  %v438 = vld [vmem:[%s4 + $0x128] sm:$0xff]
  %v439 = vld [vmem:[%s4 + $0x130] sm:$0xff]
  %v440 = vld [vmem:[%s4 + $0x138] sm:$0xff]
  %v441 = vld [vmem:[%s4 + $0x140] sm:$0xff]
  %v442 = vld [vmem:[%s4 + $0x148] sm:$0xff]
  %v443 = vld [vmem:[%s4 + $0x150] sm:$0xff]
  %v444 = vld [vmem:[%s4 + $0x158] sm:$0xff]
  %v445 = vld [vmem:[%s4 + $0x160] sm:$0xff]
  %v446 = vld [vmem:[%s4 + $0x168] sm:$0xff]
  %v447 = vld [vmem:[%s4 + $0x170] sm:$0xff]
  %v448 = vld [vmem:[%s4 + $0x178] sm:$0xff]
  %449 = vmatprep.subr.mxu0 0.0
  %450 = vmatpush1.msra.mxu0 %v401
  %451 = vmatprep.subr.mxu0 0.0
  %452 = vmatpush1.msra.mxu0 %v402
  %453 = vmatprep.subr.mxu0 0.0
  %454 = vmatpush1.msra.mxu0 %v403
  %455 = vmatprep.subr.mxu0 0.0
  %456 = vmatpush1.msra.mxu0 %v404
  %457 = vmatprep.subr.mxu0 0.0
  %458 = vmatpush1.msra.mxu0 %v405
  %459 = vmatprep.subr.mxu0 0.0
  %460 = vmatpush1.msra.mxu0 %v406
  %461 = vmatprep.subr.mxu0 0.0
  %462 = vmatpush1.msra.mxu0 %v407
  %463 = vmatprep.subr.mxu0 0.0
  %464 = vmatpush1.msra.mxu0 %v408
  %465 = vmatprep.subr.mxu0 0.0
  %466 = vmatpush1.msra.mxu0 %v409
  %467 = vmatprep.subr.mxu0 0.0
  %468 = vmatpush1.msra.mxu0 %v410
  %469 = vmatprep.subr.mxu0 0.0
  %470 = vmatpush1.msra.mxu0 %v411
  %471 = vmatprep.subr.mxu0 0.0
  %472 = vmatpush1.msra.mxu0 %v412
  %473 = vmatprep.subr.mxu0 0.0
  %474 = vmatpush1.msra.mxu0 %v413
  %475 = vmatprep.subr.mxu0 0.0
  %476 = vmatpush1.msra.mxu0 %v414
  %477 = vmatprep.subr.mxu0 0.0
  %478 = vmatpush1.msra.mxu0 %v415
  %479 = vmatprep.subr.mxu0 0.0
  %480 = vmatpush1.msra.mxu0 %v416
  %481 = vmatprep.subr.mxu0 0.0
  %482 = vmatpush1.msra.mxu0 %v417
  %483 = vmatprep.subr.mxu0 0.0
  %484 = vmatpush1.msra.mxu0 %v418
  %485 = vmatprep.subr.mxu0 0.0
  %486 = vmatpush1.msra.mxu0 %v419
  %487 = vmatprep.subr.mxu0 0.0
  %488 = vmatpush1.msra.mxu0 %v420
  %489 = vmatprep.subr.mxu0 0.0
  %490 = vmatpush1.msra.mxu0 %v421
  %491 = vmatprep.subr.mxu0 0.0
  %492 = vmatpush1.msra.mxu0 %v422
  %493 = vmatprep.subr.mxu0 0.0
  %494 = vmatpush1.msra.mxu0 %v423
  %495 = vmatprep.subr.mxu0 0.0
  %496 = vmatpush1.msra.mxu0 %v424
  %497 = vmatprep.subr.mxu0 0.0
  %498 = vmatpush1.msra.mxu0 %v425
  %499 = vmatprep.subr.mxu0 0.0
  %500 = vmatpush1.msra.mxu0 %v426
  %501 = vmatprep.subr.mxu0 0.0
  %502 = vmatpush1.msra.mxu0 %v427
  %503 = vmatprep.subr.mxu0 0.0
  %504 = vmatpush1.msra.mxu0 %v428
  %505 = vmatprep.subr.mxu0 0.0
  %506 = vmatpush1.msra.mxu0 %v429
  %507 = vmatprep.subr.mxu0 0.0
  %508 = vmatpush1.msra.mxu0 %v430
  %509 = vmatprep.subr.mxu0 0.0
  %510 = vmatpush1.msra.mxu0 %v431
  %511 = vmatprep.subr.mxu0 0.0
  %512 = vmatpush1.msra.mxu0 %v432
  %513 = vmatprep.mubr.f32.mxu0 %v385
  %514 = vmatmul.mubr.f32.gmra.mrb[0].mxu0 %v394
  %v515 = vpop.f32.mrb[0].mxu0
  %v516 = vadd.f32 0.0, %v515
  %v517 = vpop.f32.mrb[0].mxu0
  %518 = vmatprep.mubr.f32.mxu0 %v386
  %519 = vmatmul.mubr.f32.gmra.mrb[0].mxu0 %v391
  %v520 = vpop.f32.mrb[0].mxu0
  %v521 = vadd.f32 0.0, %v520
  %v522 = vpop.f32.mrb[0].mxu0
  %523 = vdwg.mxu0
  %524 = vmatprep.subr.mxu0 0.0
  %525 = vmatpush1.msra.mxu0 %v433
  %526 = vmatprep.subr.mxu0 0.0
  %527 = vmatpush1.msra.mxu0 %v434
  %528 = vmatprep.subr.mxu0 0.0
  %529 = vmatpush1.msra.mxu0 %v435
  %530 = vmatprep.subr.mxu0 0.0
  %531 = vmatpush1.msra.mxu0 %v436
  %532 = vmatprep.subr.mxu0 0.0
  %533 = vmatpush1.msra.mxu0 %v437
  %534 = vmatprep.subr.mxu0 0.0
  %535 = vmatpush1.msra.mxu0 %v438
  %536 = vmatprep.subr.mxu0 0.0
  %537 = vmatpush1.msra.mxu0 %v439
  %538 = vmatprep.subr.mxu0 0.0
  %539 = vmatpush1.msra.mxu0 %v440
  %540 = vmatprep.subr.mxu0 0.0
  %541 = vmatpush1.msra.mxu0 %v441
  %542 = vmatprep.subr.mxu0 0.0
  %543 = vmatpush1.msra.mxu0 %v442
  %544 = vmatprep.subr.mxu0 0.0
  %545 = vmatpush1.msra.mxu0 %v443
  %546 = vmatprep.subr.mxu0 0.0
  %547 = vmatpush1.msra.mxu0 %v444
  %548 = vmatprep.subr.mxu0 0.0
  %549 = vmatpush1.msra.mxu0 %v445
  %550 = vmatprep.subr.mxu0 0.0
  %551 = vmatpush1.msra.mxu0 %v446
  %552 = vmatprep.subr.mxu0 0.0
  %553 = vmatpush1.msra.mxu0 %v447
  %554 = vmatprep.subr.mxu0 0.0
  %555 = vmatpush1.msra.mxu0 %v448
  %556 = vmatprep.subr.mxu0 0.0
  %557 = vmatpush1.msra.mxu0 0.0
  %558 = vmatprep.subr.mxu0 0.0
  %559 = vmatpush1.msra.mxu0 0.0
  %560 = vmatprep.subr.mxu0 0.0
  %561 = vmatpush1.msra.mxu0 0.0
  %562 = vmatprep.subr.mxu0 0.0
  %563 = vmatpush1.msra.mxu0 0.0
  %564 = vmatprep.subr.mxu0 0.0
  %565 = vmatpush1.msra.mxu0 0.0
  %566 = vmatprep.subr.mxu0 0.0
  %567 = vmatpush1.msra.mxu0 0.0
  %568 = vmatprep.subr.mxu0 0.0
  %569 = vmatpush1.msra.mxu0 0.0
  %570 = vmatprep.subr.mxu0 0.0
  %571 = vmatpush1.msra.mxu0 0.0
  %572 = vmatprep.subr.mxu0 0.0
  %573 = vmatpush1.msra.mxu0 0.0
  %574 = vmatprep.subr.mxu0 0.0
  %575 = vmatpush1.msra.mxu0 0.0
  %576 = vmatprep.subr.mxu0 0.0
  %577 = vmatpush1.msra.mxu0 0.0
  %578 = vmatprep.subr.mxu0 0.0
  %579 = vmatpush1.msra.mxu0 0.0
  %580 = vmatprep.subr.mxu0 0.0
  %581 = vmatpush1.msra.mxu0 0.0
  %582 = vmatprep.subr.mxu0 0.0
  %583 = vmatpush1.msra.mxu0 0.0
  %584 = vmatprep.subr.mxu0 0.0
  %585 = vmatpush1.msra.mxu0 0.0
  %586 = vmatprep.subr.mxu0 0.0
  %587 = vmatpush1.msra.mxu0 0.0
  %588 = vmatprep.mubr.f32.mxu0 0.0
  %589 = vmatmul.mubr.f32.gmra.mrb[0].mxu0 %v397
  %v590 = vpop.f32.mrb[0].mxu0
  %v591 = vadd.f32 %v516, %v590
  %v592 = vpop.f32.mrb[0].mxu0
  %593 = vmatprep.mubr.f32.mxu0 0.0
  %594 = vmatmul.mubr.f32.gmra.mrb[0].mxu0 %v400
  %v595 = vpop.f32.mrb[0].mxu0
  %v596 = vadd.f32 %v521, %v595
  %v597 = vpop.f32.mrb[0].mxu0
  %598 = vdwg.mxu0
  %v599 = vadd.f32 %v591, %v596
  %v600 = vrot.slane %v599, 4
  %v601 = vadd.f32 %v599, %v600
  %v602 = vrot.slane %v601, 2
  %v603 = vadd.f32 %v601, %v602
  %v604 = vrot.slane %v603, 1
  %v605 = vadd.f32 %v603, %v604
  %v606 = vmul.f32 %v591, %v591
  %v607 = vmul.f32 %v596, %v596
  %v608 = vadd.f32 %v606, %v607
  %v609 = vrot.slane %v608, 4
  %v610 = vadd.f32 %v608, %v609
  %v611 = vrot.slane %v610, 2
  %v612 = vadd.f32 %v610, %v611
  %v613 = vrot.slane %v612, 1
  %v614 = vadd.f32 %v612, %v613
  %v615 = vsel %vm33, %v605, %v614
  %616 = vmatprep.subr.mxu0 0.0
  %617 = vmatpush1.msra.mxu0 %v262
  %618 = vmatprep.subr.mxu0 0.0
  %619 = vmatpush1.msra.mxu0 %v263
  %620 = vmatprep.subr.mxu0 0.0
  %621 = vmatpush1.msra.mxu0 %v264
  %622 = vmatprep.subr.mxu0 0.0
  %623 = vmatpush1.msra.mxu0 %v265
  %624 = vmatprep.subr.mxu0 0.0
  %625 = vmatpush1.msra.mxu0 %v266
  %626 = vmatprep.subr.mxu0 0.0
  %627 = vmatpush1.msra.mxu0 %v267
  %628 = vmatprep.subr.mxu0 0.0
  %629 = vmatpush1.msra.mxu0 %v268
  %630 = vmatprep.subr.mxu0 0.0
  %631 = vmatpush1.msra.mxu0 %v269
  %632 = vmatprep.subr.mxu0 0.0
  %633 = vmatpush1.msra.mxu0 %v270
  %634 = vmatprep.subr.mxu0 0.0
  %635 = vmatpush1.msra.mxu0 %v271
  %636 = vmatprep.subr.mxu0 0.0
  %637 = vmatpush1.msra.mxu0 %v272
  %638 = vmatprep.subr.mxu0 0.0
  %639 = vmatpush1.msra.mxu0 %v273
  %640 = vmatprep.subr.mxu0 0.0
  %641 = vmatpush1.msra.mxu0 %v274
  %642 = vmatprep.subr.mxu0 0.0
  %643 = vmatpush1.msra.mxu0 %v275
  %644 = vmatprep.subr.mxu0 0.0
  %645 = vmatpush1.msra.mxu0 %v276
  %646 = vmatprep.subr.mxu0 0.0
  %647 = vmatpush1.msra.mxu0 %v277
  %648 = vmatprep.subr.mxu0 0.0
  %649 = vmatpush1.msra.mxu0 0.0
  %650 = vmatprep.subr.mxu0 0.0
  %651 = vmatpush1.msra.mxu0 0.0
  %652 = vmatprep.subr.mxu0 0.0
  %653 = vmatpush1.msra.mxu0 0.0
  %654 = vmatprep.subr.mxu0 0.0
  %655 = vmatpush1.msra.mxu0 0.0
  %656 = vmatprep.subr.mxu0 0.0
  %657 = vmatpush1.msra.mxu0 0.0
  %658 = vmatprep.subr.mxu0 0.0
  %659 = vmatpush1.msra.mxu0 0.0
  %660 = vmatprep.subr.mxu0 0.0
  %661 = vmatpush1.msra.mxu0 0.0
  %662 = vmatprep.subr.mxu0 0.0
  %663 = vmatpush1.msra.mxu0 0.0
  %664 = vmatprep.subr.mxu0 0.0
  %665 = vmatpush1.msra.mxu0 0.0
  %666 = vmatprep.subr.mxu0 0.0
  %667 = vmatpush1.msra.mxu0 0.0
  %668 = vmatprep.subr.mxu0 0.0
  %669 = vmatpush1.msra.mxu0 0.0
  %670 = vmatprep.subr.mxu0 0.0
  %671 = vmatpush1.msra.mxu0 0.0
  %672 = vmatprep.subr.mxu0 0.0
  %673 = vmatpush1.msra.mxu0 0.0
  %674 = vmatprep.subr.mxu0 0.0
  %675 = vmatpush1.msra.mxu0 0.0
  %676 = vmatprep.subr.mxu0 0.0
  %677 = vmatpush1.msra.mxu0 0.0
  %678 = vmatprep.subr.mxu0 0.0
  %679 = vmatpush1.msra.mxu0 0.0
  %680 = vmatprep.mubr.f32.mxu0 0.0
  %681 = vmatmul.mubr.f32.gmra.mrb[0].mxu0 %v615
  %v682 = vpop.f32.mrb[0].mxu0
  %v683 = vadd.f32 0.0, %v682
  %v684 = vpop.f32.mrb[0].mxu0
  %685 = vdwg.mxu0
  %v686 = vmul.f32 %v683, %v683
  %v688 = vrot.slane %v686, 7
  %v690 = vsub.f32 %v683, %v688
  %v691 = vlaneseq
  %v692 = vshrl.u32 %v691, 7
  %v693 = vsub.s32 0, %v692
  %v694 = vrot.slane %v683, %v693
  %v695 = vsub.f32 %v591, %v694
  %v696 = vsub.f32 %v596, %v694
  %v697 = vadd.f32 %v690, 1e-05
  %v698 = vrsqrt.pop %v697
  %v699 = vlaneseq
  %v700 = vshrl.u32 %v699, 7
  %v701 = vsub.s32 1, %v700
  %v702 = vrot.slane %v698, %v701
  %v703 = vmul.f32 %v695, %v702
  %v704 = vmul.f32 %v696, %v702
  %v705 = vld [vmem:[%s5] sm:$0x1]
  %v707 = vlaneseq
  %v708 = vshrl.u32 %v707, 7
  %v709 = vsub.s32 0, %v708
  %v710 = vrot.slane %v705, %v709
  %v712 = vmul.f32 %v703, %v710
  %v713 = vmul.f32 %v704, %v710
  %v714 = vld [vmem:[%s6] sm:$0x1]
  %v716 = vlaneseq
  %v717 = vshrl.u32 %v716, 7
  %v718 = vsub.s32 0, %v717
  %v719 = vrot.slane %v714, %v718
  %v721 = vadd.f32 %v712, %v719
  %v722 = vadd.f32 %v713, %v719
  %v723 = vadd.f32 %v721, %v29
  %v724 = vadd.f32 %v722, %v30
  %v725 = vmax.f32 %v723, 0.0
  %v726 = vmax.f32 %v724, 0.0
  %727 = vst [vmem:[%s8] sm:$0xff] %v725
  %728 = vst [vmem:[%s8 + $0x8] sm:$0xff] %v726
  // Predicated region
  $region34: #{basic_block.1} parent=0 // pred_check
    _
  $region35: #{basic_block.1} parent=0 // pred_check_branch
    %730 = sbr.rel (0) target = $region37
  $region36: #{basic_block.1} parent=0 // pred_region
    _
  $region37: #{basic_block.1} parent=0 // pred_fallthru
    _
  // Predicated region
  $region38: #{basic_block.1} parent=0 // pred_check
    _
  $region39: #{basic_block.1} parent=0 // pred_check_branch
    %732 = sbr.rel (0) target = $region41
  $region40: #{basic_block.1} parent=0 // pred_region
    _
  $region41: #{basic_block.1} parent=0 // pred_fallthru
    _

</llo_original>
